<compile_context>
chip_gen: v5e
topology: v5e:2x2
jax: 0.10.0
libtpu: 0.0.40
codegen_flags: <defaults>
</compile_context>

<pallas_src>
import jax
import jax.numpy as jnp
import numpy as np
from jax.experimental import pallas as pl
from jax.experimental.pallas import tpu as pltpu

H = 32                # h_size
NUM_CLASSES = 8       # cell.num_classes
MAX_OUTDEG = 2        # max_output_degree
MAX_DEPTH = 2         # levels below the root
B_TREES = 2           # len(encs)
LANES = 128           # lane-dense output slab width

NODES_PER_TREE = sum(MAX_OUTDEG ** d for d in range(MAX_DEPTH + 1))   # 7
N_REAL = B_TREES * NODES_PER_TREE                                      # 14
N_PAD = ((N_REAL + 7) // 8) * 8                                        # 16
LP = ((B_TREES * MAX_OUTDEG ** MAX_DEPTH + 7) // 8) * 8                # 8 (padded level width)
N_LEVELS = MAX_DEPTH + 1                                               # 3
LPT = N_LEVELS * LP                                                    # 24


def _vmem():
    return pl.BlockSpec(memory_space=pltpu.MemorySpace.VMEM)


# ------------------------- Fused forward kernel -----------------------------
def tree_decoder_kernel(encs_ref, spread_ref, gather_ref, scatter_ref,
                        wub_ref, wobo_ref, slab_ref):
    f32 = jnp.float32
    # packed parameters: [W ; U ; b ; pad] and [Wo|I|0 ; bo|0 ; pad]
    W = wub_ref[0:H, :]
    U = wub_ref[H:2 * H, :]
    b = wub_ref[2 * H:2 * H + 1, :]
    wo_slab = wobo_ref[0:H, :]            # (H, 128): Wo in [0:NC], I_H in [NC:NC+H]
    bo_slab = wobo_ref[H:H + 1, :]        # (1, 128): bo in [0:NC], zeros elsewhere

    # spread_encs ∘ (enc @ W + b), batched for ALL levels in two small matmuls
    # hoisted off the serial level chain.
    encs_wb = jnp.dot(encs_ref[...], W, preferred_element_type=f32) + b        # (B, H)
    enc_proj_all = jnp.dot(spread_ref[...], encs_wb, preferred_element_type=f32)  # (LPT, H)

    # Level 0 (roots): apply_node_func_root -> no parent term, no U matmul.
    h_prev = jnp.tanh(enc_proj_all[0:LP, :])
    h_levels = [h_prev]
    # Levels 1..MAX_DEPTH: apply_node_func, statically unrolled. Only the
    # gather -> U -> tanh chain stays serial; everything else is pre/post-batched.
    for d in range(1, N_LEVELS):
        parent_h = jnp.dot(gather_ref[d - 1], h_prev, preferred_element_type=f32)  # (LP, H)
        h_d = jnp.tanh(jnp.dot(parent_h, U, preferred_element_type=f32)
                       + enc_proj_all[d * LP:(d + 1) * LP, :])
        h_levels.append(h_d)
        h_prev = h_d

    h_stack = jnp.concatenate(h_levels, axis=0)                                 # (LPT, H)
    # ONE scatter to node-major order + ONE lane-dense projection:
    # slab[:, 0:NC]      = h @ Wo + bo   (logits)
    # slab[:, NC:NC+H]   = h             (hidden states, via identity lanes)
    h_nodes = jnp.dot(scatter_ref[...], h_stack, preferred_element_type=f32)    # (N_PAD, H)
    slab_ref[...] = jnp.dot(h_nodes, wo_slab, preferred_element_type=f32) + bo_slab


# ------------------------------ Wrapper --------------------------------------
@jax.jit
def tree_decoder_forward(encs, spread_all, gather_all, scatter_all, wu_b, wo_bo):
    slab = pl.pallas_call(
        tree_decoder_kernel,
        out_shape=jax.ShapeDtypeStruct((N_PAD, LANES), jnp.float32),
        in_specs=[_vmem()] * 6,
        out_specs=_vmem(),
    )(encs, spread_all, gather_all, scatter_all, wu_b, wo_bo)
    # strip node padding; unpack h and logits from the single lane-dense slab
    node_h = slab[:N_REAL, NUM_CLASSES:NUM_CLASSES + H]
    node_logits = slab[:N_REAL, :NUM_CLASSES]
    return node_h, node_logits


# --------------------------- Static topology ---------------------------------
def build_topology():
    """Precompute batched one-hot matrices for level-order full k-ary trees.

    spread_all  : (LPT, B)      level-major row (all levels stacked) -> its tree
    gather_all  : (N_LEVELS-1, LP, LP) level-major row -> parent row in previous level
    scatter_all : (N_PAD, LPT)  level-major row (all levels stacked) -> node-major row
    """
    lvl_off = [sum(MAX_OUTDEG ** k for k in range(d)) for d in range(N_LEVELS)]
    spread = np.zeros((LPT, B_TREES), np.float32)
    gather = np.zeros((N_LEVELS - 1, LP, LP), np.float32)
    scatter = np.zeros((N_PAD, LPT), np.float32)
    for d in range(N_LEVELS):
        w = MAX_OUTDEG ** d                      # nodes per tree at this level
        pw = MAX_OUTDEG ** (d - 1) if d > 0 else 0
        for t in range(B_TREES):
            for j in range(w):
                i = t * w + j                    # level-major index within level
                spread[d * LP + i, t] = 1.0
                node_row = t * NODES_PER_TREE + lvl_off[d] + j
                scatter[node_row, d * LP + i] = 1.0
                if d > 0:
                    gather[d - 1, i, t * pw + j // MAX_OUTDEG] = 1.0
    return jnp.asarray(spread), jnp.asarray(gather), jnp.asarray(scatter)


# ------------------------------ Parameters ------------------------------------
def init_params(key):
    k1, k2, k3 = jax.random.split(key, 3)
    scale = 1.0 / jnp.sqrt(H)
    W = jax.random.normal(k1, (H, H), jnp.float32) * scale
    U = jax.random.normal(k2, (H, H), jnp.float32) * scale
    b = jnp.zeros((1, H), jnp.float32)
    Wo = jax.random.normal(k3, (H, NUM_CLASSES), jnp.float32) * scale
    bo = jnp.zeros((1, NUM_CLASSES), jnp.float32)
    return W, U, b, Wo, bo


def pack_params(W, U, b, Wo, bo):
    """One-time packing (NOT in the per-call path): [W;U;b] and [Wo|I ; bo] slabs."""
    wu_b = jnp.concatenate(
        [W, U, b, jnp.zeros((7, H), jnp.float32)], axis=0)                    # (2H+8, H)
    wo_slab = jnp.concatenate(
        [Wo, jnp.eye(H, dtype=jnp.float32),
         jnp.zeros((H, LANES - NUM_CLASSES - H), jnp.float32)], axis=1)       # (H, 128)
    bo_slab = jnp.concatenate(
        [bo, jnp.zeros((1, LANES - NUM_CLASSES), jnp.float32)], axis=1)       # (1, 128)
    wo_bo = jnp.concatenate(
        [wo_slab, bo_slab, jnp.zeros((7, LANES), jnp.float32)], axis=0)       # (H+8, 128)
    return wu_b, wo_bo


# ------------------------------ Reference -------------------------------------
def reference_forward(encs, W, U, b, Wo, bo):
    """Pure-JAX node-by-node reference of the training forward path (HIGHEST precision)."""
    hp = jax.lax.Precision.HIGHEST
    dot = lambda a, c: jnp.dot(a, c, precision=hp)
    h_list = []
    for t in range(B_TREES):
        tree_h = []
        k = 0
        for d in range(N_LEVELS):
            for _ in range(MAX_OUTDEG ** d):
                e = encs[t]
                if k == 0:
                    hn = jnp.tanh(dot(e, W) + b[0])                                    # root
                else:
                    hn = jnp.tanh(dot(tree_h[(k - 1) // MAX_OUTDEG], U) + dot(e, W) + b[0])
                tree_h.append(hn)
                k += 1
        h_list.extend(tree_h)
    h_ref = jnp.stack(h_list)
    logits_ref = dot(h_ref, Wo) + bo
    return h_ref, logits_ref


if __name__ == "__main__":
    key = jax.random.PRNGKey(0)
    k_enc, k_par = jax.random.split(key)
    encs = jax.random.normal(k_enc, (B_TREES, H), jnp.float32)
    W, U, b, Wo, bo = init_params(k_par)
    spread_all, gather_all, scatter_all = build_topology()
    wu_b, wo_bo = pack_params(W, U, b, Wo, bo)

    node_h, node_logits = tree_decoder_forward(encs, spread_all, gather_all,
                                               scatter_all, wu_b, wo_bo)
    node_h = jax.block_until_ready(node_h)
    node_logits = jax.block_until_ready(node_logits)

    assert node_h.shape == (N_REAL, H)
    assert node_logits.shape == (N_REAL, NUM_CLASSES)
    assert bool(jnp.all(jnp.isfinite(node_h)))
    assert bool(jnp.all(jnp.isfinite(node_logits)))

    # numerical check against the pure-JAX reference (tightened from 3e-2)
    h_ref, logits_ref = reference_forward(encs, W, U, b, Wo, bo)
    assert bool(jnp.allclose(node_h, h_ref, atol=1e-4, rtol=1e-4))
    assert bool(jnp.allclose(node_logits, logits_ref, atol=1e-4, rtol=1e-4))

    print("KERNEL_OK")
</pallas_src>

<mosaic_0001>
module attributes {stable_mosaic.version = 11 : i64} {
  func.func @tree_decoder_kernel(%arg0: memref<2x32xf32, #tpu.memory_space<vmem>>, %arg1: memref<24x2xf32, #tpu.memory_space<vmem>>, %arg2: memref<2x8x8xf32, #tpu.memory_space<vmem>>, %arg3: memref<16x24xf32, #tpu.memory_space<vmem>>, %arg4: memref<72x32xf32, #tpu.memory_space<vmem>>, %arg5: memref<40x128xf32, #tpu.memory_space<vmem>>, %arg6: memref<16x128xf32, #tpu.memory_space<vmem>>) attributes {dimension_semantics = [], scalar_prefetch = 0 : i64, scratch_operands = 0 : i64, tpu.core_type = #tpu.core_type<tc>} {
    %c0 = arith.constant 0 : index
    %c0_0 = arith.constant 0 : index
    %0 = vector.load %arg4[%c0, %c0_0] : memref<72x32xf32, #tpu.memory_space<vmem>>, vector<32x32xf32>
    %c32 = arith.constant 32 : index
    %c0_1 = arith.constant 0 : index
    %1 = vector.load %arg4[%c32, %c0_1] : memref<72x32xf32, #tpu.memory_space<vmem>>, vector<32x32xf32>
    %c64 = arith.constant 64 : index
    %c0_2 = arith.constant 0 : index
    %2 = vector.load %arg4[%c64, %c0_2] : memref<72x32xf32, #tpu.memory_space<vmem>>, vector<1x32xf32>
    %c0_3 = arith.constant 0 : index
    %c0_4 = arith.constant 0 : index
    %3 = vector.load %arg5[%c0_3, %c0_4] : memref<40x128xf32, #tpu.memory_space<vmem>>, vector<32x128xf32>
    %c32_5 = arith.constant 32 : index
    %c0_6 = arith.constant 0 : index
    %4 = vector.load %arg5[%c32_5, %c0_6] : memref<40x128xf32, #tpu.memory_space<vmem>>, vector<1x128xf32>
    %c0_7 = arith.constant 0 : index
    %c0_8 = arith.constant 0 : index
    %5 = vector.load %arg0[%c0_7, %c0_8] : memref<2x32xf32, #tpu.memory_space<vmem>>, vector<2x32xf32>
    %cst = arith.constant dense<0.000000e+00> : vector<2x32xf32>
    %6 = tpu.matmul %5, %0, %cst {dimension_numbers = #tpu.dot_dimension_numbers<[1], [0], [0], [1], [0, 0, 1, 1], [], []>} : vector<2x32xf32>, vector<32x32xf32>, vector<2x32xf32> -> vector<2x32xf32>
    %7 = vector.broadcast %2 : vector<1x32xf32> to vector<2x32xf32>
    %8 = arith.addf %6, %7 : vector<2x32xf32>
    %c0_9 = arith.constant 0 : index
    %c0_10 = arith.constant 0 : index
    %9 = vector.load %arg1[%c0_9, %c0_10] : memref<24x2xf32, #tpu.memory_space<vmem>>, vector<24x2xf32>
    %cst_11 = arith.constant dense<0.000000e+00> : vector<24x32xf32>
    %10 = tpu.matmul %9, %8, %cst_11 {dimension_numbers = #tpu.dot_dimension_numbers<[1], [0], [0], [1], [0, 0, 1, 1], [], []>} : vector<24x2xf32>, vector<2x32xf32>, vector<24x32xf32> -> vector<24x32xf32>
    %11 = vector.extract_strided_slice %10 {offsets = [0, 0], sizes = [8, 32], strides = [1, 1]} : vector<24x32xf32> to vector<8x32xf32>
    %12 = math.tanh %11 : vector<8x32xf32>
    %c0_12 = arith.constant 0 : index
    %c0_13 = arith.constant 0 : index
    %c0_14 = arith.constant 0 : index
    %13 = vector.load %arg2[%c0_12, %c0_13, %c0_14] : memref<2x8x8xf32, #tpu.memory_space<vmem>>, vector<1x8x8xf32>
    %14 = vector.shape_cast %13 : vector<1x8x8xf32> to vector<8x8xf32>
    %cst_15 = arith.constant dense<0.000000e+00> : vector<8x32xf32>
    %15 = tpu.matmul %14, %12, %cst_15 {dimension_numbers = #tpu.dot_dimension_numbers<[1], [0], [0], [1], [0, 0, 1, 1], [], []>} : vector<8x8xf32>, vector<8x32xf32>, vector<8x32xf32> -> vector<8x32xf32>
    %cst_16 = arith.constant dense<0.000000e+00> : vector<8x32xf32>
    %16 = tpu.matmul %15, %1, %cst_16 {dimension_numbers = #tpu.dot_dimension_numbers<[1], [0], [0], [1], [0, 0, 1, 1], [], []>} : vector<8x32xf32>, vector<32x32xf32>, vector<8x32xf32> -> vector<8x32xf32>
    %17 = vector.extract_strided_slice %10 {offsets = [8, 0], sizes = [8, 32], strides = [1, 1]} : vector<24x32xf32> to vector<8x32xf32>
    %18 = arith.addf %16, %17 : vector<8x32xf32>
    %19 = math.tanh %18 : vector<8x32xf32>
    %c1 = arith.constant 1 : index
    %c0_17 = arith.constant 0 : index
    %c0_18 = arith.constant 0 : index
    %20 = vector.load %arg2[%c1, %c0_17, %c0_18] : memref<2x8x8xf32, #tpu.memory_space<vmem>>, vector<1x8x8xf32>
    %21 = vector.shape_cast %20 : vector<1x8x8xf32> to vector<8x8xf32>
    %cst_19 = arith.constant dense<0.000000e+00> : vector<8x32xf32>
    %22 = tpu.matmul %21, %19, %cst_19 {dimension_numbers = #tpu.dot_dimension_numbers<[1], [0], [0], [1], [0, 0, 1, 1], [], []>} : vector<8x8xf32>, vector<8x32xf32>, vector<8x32xf32> -> vector<8x32xf32>
    %cst_20 = arith.constant dense<0.000000e+00> : vector<8x32xf32>
    %23 = tpu.matmul %22, %1, %cst_20 {dimension_numbers = #tpu.dot_dimension_numbers<[1], [0], [0], [1], [0, 0, 1, 1], [], []>} : vector<8x32xf32>, vector<32x32xf32>, vector<8x32xf32> -> vector<8x32xf32>
    %24 = vector.extract_strided_slice %10 {offsets = [16, 0], sizes = [8, 32], strides = [1, 1]} : vector<24x32xf32> to vector<8x32xf32>
    %25 = arith.addf %23, %24 : vector<8x32xf32>
    %26 = math.tanh %25 : vector<8x32xf32>
    %27 = tpu.concatenate %12, %19, %26 in 0 : vector<8x32xf32>, vector<8x32xf32>, vector<8x32xf32> -> vector<24x32xf32>
    %c0_21 = arith.constant 0 : index
    %c0_22 = arith.constant 0 : index
    %28 = vector.load %arg3[%c0_21, %c0_22] : memref<16x24xf32, #tpu.memory_space<vmem>>, vector<16x24xf32>
    %cst_23 = arith.constant dense<0.000000e+00> : vector<16x32xf32>
    %29 = tpu.matmul %28, %27, %cst_23 {dimension_numbers = #tpu.dot_dimension_numbers<[1], [0], [0], [1], [0, 0, 1, 1], [], []>} : vector<16x24xf32>, vector<24x32xf32>, vector<16x32xf32> -> vector<16x32xf32>
    %cst_24 = arith.constant dense<0.000000e+00> : vector<16x128xf32>
    %30 = tpu.matmul %29, %3, %cst_24 {dimension_numbers = #tpu.dot_dimension_numbers<[1], [0], [0], [1], [0, 0, 1, 1], [], []>} : vector<16x32xf32>, vector<32x128xf32>, vector<16x128xf32> -> vector<16x128xf32>
    %31 = vector.broadcast %4 : vector<1x128xf32> to vector<16x128xf32>
    %32 = arith.addf %30, %31 : vector<16x128xf32>
    %c0_25 = arith.constant 0 : index
    %c0_26 = arith.constant 0 : index
    %33 = vector.load %arg6[%c0_25, %c0_26] : memref<16x128xf32, #tpu.memory_space<vmem>>, vector<16x128xf32>
    tpu.vector_store %arg6[%c0_25, %c0_26], %32 {strides = array<i32>} : memref<16x128xf32, #tpu.memory_space<vmem>>, vector<16x128xf32>,
    return
  }
}

</mosaic_0001>

<llo_original>
// kernel: tree_decoder_forward.1
$region0: #{tree_decoder_forward.1}
  #allocation0 [shape = 'u32[]', space=smem, size = 0x4, offset = 0x4, fixed_abs, tag = 'smem constant byte address 0x4 - core index']
  #allocation1 [shape = 'u32[72,128]{1,0:T(1,128)}', space=vmem, size = 0x9000, scoped, tag = 'internal scratch']
  %s0 = inlined_call_operand.vmem [shape: f32[2,32], index: 0, kind: input, shape index: {}]
  %s1 = inlined_call_operand.vmem [shape: f32[24,2], index: 1, kind: input, shape index: {}]
  %s2 = inlined_call_operand.vmem [shape: f32[2,8,8], index: 2, kind: input, shape index: {}]
  %s3 = inlined_call_operand.vmem [shape: f32[16,24], index: 3, kind: input, shape index: {}]
  %s4 = inlined_call_operand.vmem [shape: f32[72,32], index: 4, kind: input, shape index: {}]
  %s5 = inlined_call_operand.vmem [shape: f32[40,128], index: 5, kind: input, shape index: {}]
  %s6 = inlined_call_operand.vmem [shape: f32[16,128], index: 6, kind: output, shape index: {}]
  %s7 = sld [smem:[#allocation0]]
  $region34: #{tree_decoder_forward.1} parent=0
    _
  %s9 = ssub.s32 1, %s7
  %s10 = scalar_select 0, %s9, %s7
  // Predicated region
  $region2: #{tree_decoder_forward.1} parent=0 // pred_check
    _
  $region3: #{tree_decoder_forward.1} parent=0 // pred_check_branch
    %12 = sbr.rel (0) target = $region5
  $region4: #{tree_decoder_forward.1} parent=0 // pred_region
    _
  $region5: #{tree_decoder_forward.1} parent=0 // pred_fallthru
    _
  // Predicated region
  $region6: #{tree_decoder_forward.1} parent=0 // pred_check
    _
  $region7: #{tree_decoder_forward.1} parent=0 // pred_check_branch
    %14 = sbr.rel (0) target = $region9
  $region8: #{tree_decoder_forward.1} parent=0 // pred_region
    _
  $region9: #{tree_decoder_forward.1} parent=0 // pred_fallthru
    _
  // Predicated region
  $region10: #{tree_decoder_forward.1} parent=0 // pred_check
    _
  $region11: #{tree_decoder_forward.1} parent=0 // pred_check_branch
    %16 = sbr.rel (0) target = $region13
  $region12: #{tree_decoder_forward.1} parent=0 // pred_region
    _
  $region13: #{tree_decoder_forward.1} parent=0 // pred_fallthru
    _
  // Predicated region
  $region14: #{tree_decoder_forward.1} parent=0 // pred_check
    _
  $region15: #{tree_decoder_forward.1} parent=0 // pred_check_branch
    %18 = sbr.rel (0) target = $region17
  $region16: #{tree_decoder_forward.1} parent=0 // pred_region
    _
  $region17: #{tree_decoder_forward.1} parent=0 // pred_fallthru
    _
  // Predicated region
  $region18: #{tree_decoder_forward.1} parent=0 // pred_check
    _
  $region19: #{tree_decoder_forward.1} parent=0 // pred_check_branch
    %20 = sbr.rel (0) target = $region21
  $region20: #{tree_decoder_forward.1} parent=0 // pred_region
    _
  $region21: #{tree_decoder_forward.1} parent=0 // pred_fallthru
    _
  // Predicated region
  $region22: #{tree_decoder_forward.1} parent=0 // pred_check
    _
  $region23: #{tree_decoder_forward.1} parent=0 // pred_check_branch
    %22 = sbr.rel (0) target = $region25
  $region24: #{tree_decoder_forward.1} parent=0 // pred_region
    _
  $region25: #{tree_decoder_forward.1} parent=0 // pred_fallthru
    _
  %v23 = vld [vmem:[%s4] sm:$0xff]
  %v24 = vld [vmem:[%s4 + $0x8] sm:$0xff]
  %v25 = vld [vmem:[%s4 + $0x10] sm:$0xff]
  %v26 = vld [vmem:[%s4 + $0x18] sm:$0xff]
  %v27 = vld [vmem:[%s4 + $0x20] sm:$0xff]
  %v28 = vld [vmem:[%s4 + $0x28] sm:$0xff]
  %v29 = vld [vmem:[%s4 + $0x30] sm:$0xff]
  %v30 = vld [vmem:[%s4 + $0x38] sm:$0xff]
  %v31 = vld [vmem:[%s4 + $0x40] sm:$0x1]
  %v32 = vld [vmem:[%s5] sm:$0xff]
  %v33 = vld [vmem:[%s5 + $0x8] sm:$0xff]
  %v34 = vld [vmem:[%s5 + $0x10] sm:$0xff]
  %v35 = vld [vmem:[%s5 + $0x18] sm:$0xff]
  %v36 = vld [vmem:[%s5 + $0x20] sm:$0x1]
  %v37 = vld [vmem:[%s0] sm:$0x3]
  %v38 = vperm.slane %v31, 0
  %vm39 = vcmask 261120
  %v41 = vsel %vm39, %v37, 0
  %43 = vmatpush.msra.mxu0 0.0
  %44 = vmatpush.msra.mxu0 0.0
  %45 = vmatpush.msra.mxu0 0.0
  %46 = vmatpush.msra.mxu0 0.0
  %47 = vmatpush.msra.mxu0 0.0
  %48 = vmatpush.msra.mxu0 0.0
  %49 = vmatpush.msra.mxu0 0.0
  %50 = vmatpush.msra.mxu0 0.0
  %51 = vmatpush.msra.mxu0 0.0
  %52 = vmatpush.msra.mxu0 0.0
  %53 = vmatpush.msra.mxu0 0.0
  %54 = vmatpush.msra.mxu0 0.0
  %55 = vmatpush.msra.mxu0 %v26
  %56 = vmatpush.msra.mxu0 %v25
  %57 = vmatpush.msra.mxu0 %v24
  %58 = vmatpush.msra.mxu0 %v23
  %59 = vmatmul.f32.gmra.mxu0 %v41
  %v60 = vpop.f32.mrf.mxu0
  %v61 = vadd.f32 %v38, %v60
  %62 = vdwg.mxu0
  %v63 = vld [vmem:[%s1] sm:$0xff]
  %v64 = vld [vmem:[%s1 + $0x8] sm:$0xff]
  %v65 = vld [vmem:[%s1 + $0x10] sm:$0xff]
  %vm66 = vcmask 15360
  %v68 = vsel %vm66, %v63, 0
  %v71 = vsel %vm66, %v64, 0
  %v74 = vsel %vm66, %v65, 0
  %vm76 = vcmask 1041408
  %v78 = vsel %vm76, %v61, 0
  %80 = vmatpush.msra.mxu0 0.0
  %81 = vmatpush.msra.mxu0 0.0
  %82 = vmatpush.msra.mxu0 0.0
  %83 = vmatpush.msra.mxu0 0.0
  %84 = vmatpush.msra.mxu0 0.0
  %85 = vmatpush.msra.mxu0 0.0
  %86 = vmatpush.msra.mxu0 0.0
  %87 = vmatpush.msra.mxu0 0.0
  %88 = vmatpush.msra.mxu0 0.0
  %89 = vmatpush.msra.mxu0 0.0
  %90 = vmatpush.msra.mxu0 0.0
  %91 = vmatpush.msra.mxu0 0.0
  %92 = vmatpush.msra.mxu0 0.0
  %93 = vmatpush.msra.mxu0 0.0
  %94 = vmatpush.msra.mxu0 0.0
  %95 = vmatpush.msra.mxu0 %v78
  %96 = vmatmul.f32.gmra.mxu0 %v68
  %v97 = vpop.f32.mrf.mxu0
  %v98 = vadd.f32 0.0, %v97
  %99 = vmatmul.f32.gmra.mxu0 %v71
  %v100 = vpop.f32.mrf.mxu0
  %v101 = vadd.f32 0.0, %v100
  %102 = vmatmul.f32.gmra.mxu0 %v74
  %v103 = vpop.f32.mrf.mxu0
  %v104 = vadd.f32 0.0, %v103
  %105 = vdwg.mxu0
  %v106 = vtanh.pop %v98
  %v107 = vld [vmem:[%s2] sm:$0xff]
  %vm108 = vcmask 64512
  %v110 = vsel %vm108, %v107, 0
  %112 = vmatpush.msra.mxu0 0.0
  %113 = vmatpush.msra.mxu0 0.0
  %114 = vmatpush.msra.mxu0 0.0
  %115 = vmatpush.msra.mxu0 0.0
  %116 = vmatpush.msra.mxu0 0.0
  %117 = vmatpush.msra.mxu0 0.0
  %118 = vmatpush.msra.mxu0 0.0
  %119 = vmatpush.msra.mxu0 0.0
  %120 = vmatpush.msra.mxu0 0.0
  %121 = vmatpush.msra.mxu0 0.0
  %122 = vmatpush.msra.mxu0 0.0
  %123 = vmatpush.msra.mxu0 0.0
  %124 = vmatpush.msra.mxu0 0.0
  %125 = vmatpush.msra.mxu0 0.0
  %126 = vmatpush.msra.mxu0 0.0
  %127 = vmatpush.msra.mxu0 %v106
  %128 = vmatmul.f32.gmra.mxu0 %v110
  %v129 = vpop.f32.mrf.mxu0
  %v130 = vadd.f32 0.0, %v129
  %131 = vdwg.mxu0
  %v133 = vsel %vm39, %v130, 0
  %135 = vmatpush.msra.mxu0 0.0
  %136 = vmatpush.msra.mxu0 0.0
  %137 = vmatpush.msra.mxu0 0.0
  %138 = vmatpush.msra.mxu0 0.0
  %139 = vmatpush.msra.mxu0 0.0
  %140 = vmatpush.msra.mxu0 0.0
  %141 = vmatpush.msra.mxu0 0.0
  %142 = vmatpush.msra.mxu0 0.0
  %143 = vmatpush.msra.mxu0 0.0
  %144 = vmatpush.msra.mxu0 0.0
  %145 = vmatpush.msra.mxu0 0.0
  %146 = vmatpush.msra.mxu0 0.0
  %147 = vmatpush.msra.mxu0 %v30
  %148 = vmatpush.msra.mxu0 %v29
  %149 = vmatpush.msra.mxu0 %v28
  %150 = vmatpush.msra.mxu0 %v27
  %151 = vmatmul.f32.gmra.mxu0 %v133
  %v152 = vpop.f32.mrf.mxu0
  %v153 = vadd.f32 %v101, %v152
  %154 = vdwg.mxu0
  %v155 = vtanh.pop %v153
  %s156 = scalar_lea.vmem %s2, 8
  %v157 = vld [vmem:[%s156] sm:$0xff]
  %v159 = vsel %vm108, %v157, 0
  %161 = vmatpush.msra.mxu0 0.0
  %162 = vmatpush.msra.mxu0 0.0
  %163 = vmatpush.msra.mxu0 0.0
  %164 = vmatpush.msra.mxu0 0.0
  %165 = vmatpush.msra.mxu0 0.0
  %166 = vmatpush.msra.mxu0 0.0
  %167 = vmatpush.msra.mxu0 0.0
  %168 = vmatpush.msra.mxu0 0.0
  %169 = vmatpush.msra.mxu0 0.0
  %170 = vmatpush.msra.mxu0 0.0
  %171 = vmatpush.msra.mxu0 0.0
  %172 = vmatpush.msra.mxu0 0.0
  %173 = vmatpush.msra.mxu0 0.0
  %174 = vmatpush.msra.mxu0 0.0
  %175 = vmatpush.msra.mxu0 0.0
  %176 = vmatpush.msra.mxu0 %v155
  %177 = vmatmul.f32.gmra.mxu0 %v159
  %v178 = vpop.f32.mrf.mxu0
  %v179 = vadd.f32 0.0, %v178
  %180 = vdwg.mxu0
  %v182 = vsel %vm39, %v179, 0
  %184 = vmatpush.msra.mxu0 0.0
  %185 = vmatpush.msra.mxu0 0.0
  %186 = vmatpush.msra.mxu0 0.0
  %187 = vmatpush.msra.mxu0 0.0
  %188 = vmatpush.msra.mxu0 0.0
  %189 = vmatpush.msra.mxu0 0.0
  %190 = vmatpush.msra.mxu0 0.0
  %191 = vmatpush.msra.mxu0 0.0
  %192 = vmatpush.msra.mxu0 0.0
  %193 = vmatpush.msra.mxu0 0.0
  %194 = vmatpush.msra.mxu0 0.0
  %195 = vmatpush.msra.mxu0 0.0
  %196 = vmatpush.msra.mxu0 %v30
  %197 = vmatpush.msra.mxu0 %v29
  %198 = vmatpush.msra.mxu0 %v28
  %199 = vmatpush.msra.mxu0 %v27
  %200 = vmatmul.f32.gmra.mxu0 %v182
  %v201 = vpop.f32.mrf.mxu0
  %v202 = vadd.f32 %v104, %v201
  %203 = vdwg.mxu0
  %v204 = vtanh.pop %v202
  %v205 = vld [vmem:[%s3] sm:$0xff]
  %v206 = vld [vmem:[%s3 + $0x8] sm:$0xff]
  %vm207 = vcmask 195584
  %v209 = vsel %vm207, %v205, 0
  %v212 = vsel %vm207, %v206, 0
  %214 = vmatpush.msra.mxu0 0.0
  %215 = vmatpush.msra.mxu0 0.0
  %216 = vmatpush.msra.mxu0 0.0
  %217 = vmatpush.msra.mxu0 0.0
  %218 = vmatpush.msra.mxu0 0.0
  %219 = vmatpush.msra.mxu0 0.0
  %220 = vmatpush.msra.mxu0 0.0
  %221 = vmatpush.msra.mxu0 0.0
  %222 = vmatpush.msra.mxu0 0.0
  %223 = vmatpush.msra.mxu0 0.0
  %224 = vmatpush.msra.mxu0 0.0
  %225 = vmatpush.msra.mxu0 0.0
  %226 = vmatpush.msra.mxu0 0.0
  %227 = vmatpush.msra.mxu0 %v204
  %228 = vmatpush.msra.mxu0 %v155
  %229 = vmatpush.msra.mxu0 %v106
  %230 = vmatmul.f32.gmra.mxu0 %v209
  %v231 = vpop.f32.mrf.mxu0
  %v232 = vadd.f32 0.0, %v231
  %233 = vmatmul.f32.gmra.mxu0 %v212
  %v234 = vpop.f32.mrf.mxu0
  %v235 = vadd.f32 0.0, %v234
  %236 = vdwg.mxu0
  %v237 = vperm.slane %v36, 0
  %v239 = vsel %vm39, %v232, 0
  %v242 = vsel %vm39, %v235, 0
  %244 = vmatpush.msra.mxu0 0.0
  %245 = vmatpush.msra.mxu0 0.0
  %246 = vmatpush.msra.mxu0 0.0
  %247 = vmatpush.msra.mxu0 0.0
  %248 = vmatpush.msra.mxu0 0.0
  %249 = vmatpush.msra.mxu0 0.0
  %250 = vmatpush.msra.mxu0 0.0
  %251 = vmatpush.msra.mxu0 0.0
  %252 = vmatpush.msra.mxu0 0.0
  %253 = vmatpush.msra.mxu0 0.0
  %254 = vmatpush.msra.mxu0 0.0
  %255 = vmatpush.msra.mxu0 0.0
  %256 = vmatpush.msra.mxu0 %v35
  %257 = vmatpush.msra.mxu0 %v34
  %258 = vmatpush.msra.mxu0 %v33
  %259 = vmatpush.msra.mxu0 %v32
  %260 = vmatmul.f32.gmra.mxu0 %v239
  %v261 = vpop.f32.mrf.mxu0
  %v262 = vadd.f32 %v237, %v261
  %263 = vmatmul.f32.gmra.mxu0 %v242
  %v264 = vpop.f32.mrf.mxu0
  %v265 = vadd.f32 %v237, %v264
  %266 = vdwg.mxu0
  %267 = vst [vmem:[%s6] sm:$0xff] %v262
  %268 = vst [vmem:[%s6 + $0x8] sm:$0xff] %v265
  // Predicated region
  $region26: #{tree_decoder_forward.1} parent=0 // pred_check
    _
  $region27: #{tree_decoder_forward.1} parent=0 // pred_check_branch
    %270 = sbr.rel (0) target = $region29
  $region28: #{tree_decoder_forward.1} parent=0 // pred_region
    _
  $region29: #{tree_decoder_forward.1} parent=0 // pred_fallthru
    _
  // Predicated region
  $region30: #{tree_decoder_forward.1} parent=0 // pred_check
    _
  $region31: #{tree_decoder_forward.1} parent=0 // pred_check_branch
    %272 = sbr.rel (0) target = $region33
  $region32: #{tree_decoder_forward.1} parent=0 // pred_region
    _
  $region33: #{tree_decoder_forward.1} parent=0 // pred_fallthru
    _

</llo_original>
